<compile_context>
chip_gen: v6e
topology: v6e:2x2x1
jax: 0.10.0
libtpu: 0.0.40
codegen_flags: <defaults>
</compile_context>

<pallas_src>
import functools

import jax
import jax.numpy as jnp
from jax import lax
from jax.experimental import pallas as pl
from jax.experimental.pallas import tpu as pltpu


_NEG_BIG = -1e30  # finite "-inf" used to mask padded key columns (NaN-proof)


def _round_up(x: int, m: int) -> int:
    return ((x + m - 1) // m) * m


def _flash_sdpa_kernel(q_ref, k_ref, v_ref, o_ref,
                       qs_ref, m_ref, l_ref, acc_ref, *,
                       inv_temperature, lk_real, tk, need_mask):
    # q_ref: (tq, D), k_ref: (tk, D), v_ref: (tk, Dv), o_ref: (tq, Dv)
    kv = pl.program_id(2)
    last_kv = pl.num_programs(2) - 1

    @pl.when(kv == 0)
    def _init():
        # Scale q once per q tile (the q block is resident across the kv axis),
        # instead of re-scaling it on every kv step.
        qs_ref[...] = (q_ref[...].astype(jnp.float32) * inv_temperature
                       ).astype(qs_ref.dtype)
        m_ref[...] = jnp.full(m_ref.shape, -jnp.inf, dtype=m_ref.dtype)
        l_ref[...] = jnp.zeros(l_ref.shape, dtype=l_ref.dtype)
        acc_ref[...] = jnp.zeros(acc_ref.shape, dtype=acc_ref.dtype)

    # Contract the last dims of q and k directly (no transposed K copy); MXU
    # consumes the native input dtype and accumulates in f32.
    s = lax.dot_general(qs_ref[...], k_ref[...], (((1,), (1,)), ((), ())),
                        preferred_element_type=jnp.float32)

    def online_softmax_update(scores):
        m_prev = m_ref[...]
        m_new = jnp.maximum(m_prev, jnp.max(scores, axis=-1, keepdims=True))
        alpha = jnp.exp(m_prev - m_new)
        p = jnp.exp(scores - m_new)
        l_ref[...] = alpha * l_ref[...] + jnp.sum(p, axis=-1, keepdims=True)
        acc_ref[...] = alpha * acc_ref[...] + jnp.dot(
            p.astype(v_ref.dtype), v_ref[...],
            preferred_element_type=jnp.float32)
        m_ref[...] = m_new

    if need_mask:
        # Padded key columns only exist in the last kv tile; pay the masking
        # cost (iota + cmp + select) there only.
        @pl.when(kv == last_kv)
        def _masked():
            col = kv * tk + lax.broadcasted_iota(jnp.int32, s.shape, 1)
            online_softmax_update(jnp.where(col < lk_real, s, _NEG_BIG))

        @pl.when(kv != last_kv)
        def _unmasked():
            online_softmax_update(s)
    else:
        online_softmax_update(s)

    @pl.when(kv == last_kv)
    def _finalize():
        # Normalize the output (O(tq*Dv)), not the probability matrix.
        l = l_ref[...]
        inv_l = pl.reciprocal(l, approx=True)   # EUP slot, free at finalize
        inv_l = inv_l * (2.0 - l * inv_l)       # one Newton step -> ~f32 accuracy
        o_ref[...] = (acc_ref[...] * inv_l).astype(o_ref.dtype)


def scaled_dot_product_attention(q, k, v, temperature, *, tq=256, tk=512,
                                 compute_dtype=None):
    """q: (B, Lq, D), k: (B, Lk, D), v: (B, Lk, Dv) -> (B, Lq, Dv)."""
    B, Lq, D = q.shape
    Bk, Lk, Dk = k.shape
    Bv, Lkv, Dv = v.shape
    assert B == Bk == Bv and D == Dk and Lk == Lkv

    out_dtype = q.dtype
    if compute_dtype is not None:
        # e.g. bf16 on v6e/v7x: feeds the MXU at its native rate and halves
        # q/k/v HBM traffic; accumulation inside the kernel stays f32.
        q = q.astype(compute_dtype)
        k = k.astype(compute_dtype)
        v = v.astype(compute_dtype)

    # dtype-aware sublane granularity (f32: 8 rows per vreg, bf16: 16, 8-bit: 32)
    sub = {4: 8, 2: 16, 1: 32}.get(jnp.dtype(q.dtype).itemsize, 8)

    # Query tile: full dim if it fits in one tile, else a sublane-aligned tile;
    # the Lq remainder is handled by the cdiv grid (no q padding, no out slice).
    if Lq <= tq:
        tq = Lq
    else:
        tq = max(sub, (tq // sub) * sub)

    # Key/value tile: pick ~tk-sized tiles, balanced across cdiv(Lk, tk) steps,
    # so that only a tiny zero-pad of k/v is needed (padded key columns are
    # masked in the kernel's last kv tile).
    n_kv = pl.cdiv(Lk, max(tk, 1))
    tk = _round_up(pl.cdiv(Lk, n_kv), sub)
    lk_pad = tk * n_kv
    if lk_pad != Lk:
        k = jnp.pad(k, ((0, 0), (0, lk_pad - Lk), (0, 0)))
        v = jnp.pad(v, ((0, 0), (0, lk_pad - Lk), (0, 0)))

    kernel = functools.partial(
        _flash_sdpa_kernel,
        inv_temperature=1.0 / float(temperature),
        lk_real=Lk,
        tk=tk,
        need_mask=(lk_pad != Lk),
    )

    grid = (B, pl.cdiv(Lq, tq), lk_pad // tk)

    out = pl.pallas_call(
        kernel,
        out_shape=jax.ShapeDtypeStruct((B, Lq, Dv), out_dtype),
        grid_spec=pltpu.PrefetchScalarGridSpec(
            num_scalar_prefetch=0,
            grid=grid,
            in_specs=[
                pl.BlockSpec((None, tq, D), lambda b, i, j: (b, i, 0)),
                pl.BlockSpec((None, tk, D), lambda b, i, j: (b, j, 0)),
                pl.BlockSpec((None, tk, Dv), lambda b, i, j: (b, j, 0)),
            ],
            out_specs=pl.BlockSpec((None, tq, Dv), lambda b, i, j: (b, i, 0)),
            scratch_shapes=[
                pltpu.VMEM((tq, D), q.dtype),        # q * (1/temperature), resident
                pltpu.VMEM((tq, 1), jnp.float32),    # running max m
                pltpu.VMEM((tq, 1), jnp.float32),    # running denom l
                pltpu.VMEM((tq, Dv), jnp.float32),   # output accumulator
            ],
        ),
        compiler_params=pltpu.CompilerParams(
            dimension_semantics=("parallel", "parallel", "arbitrary")),
    )(q, k, v)
    return out


def _reference(q, k, v, temperature):
    attn = jnp.einsum("bqd,bkd->bqk", q, k) / temperature
    attn = jax.nn.softmax(attn, axis=2)
    return jnp.einsum("bqk,bkd->bqd", attn, v)


if __name__ == "__main__":
    key = jax.random.PRNGKey(0)
    ks = jax.random.split(key, 9)

    # 1) Small shapes matching the PyTorch module's bmm convention.
    B, Lq, Lk, D, Dv = 2, 8, 8, 32, 32
    temperature = float(D) ** 0.5  # typical: sqrt(d_k)
    q = jax.random.normal(ks[0], (B, Lq, D), dtype=jnp.float32)
    k = jax.random.normal(ks[1], (B, Lk, D), dtype=jnp.float32)
    v = jax.random.normal(ks[2], (B, Lk, Dv), dtype=jnp.float32)

    out = jax.block_until_ready(scaled_dot_product_attention(q, k, v, temperature))
    ref = _reference(q, k, v, temperature)
    assert out.shape == (B, Lq, Dv)
    assert jnp.allclose(out, ref, atol=1e-4, rtol=1e-4), "mismatch (small)"

    # 2) f32, multi-kv-tile, partial last q tile (cdiv grid), key pad + mask,
    #    non-128 feature dims (no feature padding).
    B2, Lq2, Lk2, D2, Dv2 = 2, 300, 1100, 64, 48
    temperature2 = float(D2) ** 0.5
    q2 = jax.random.normal(ks[3], (B2, Lq2, D2), dtype=jnp.float32)
    k2 = jax.random.normal(ks[4], (B2, Lk2, D2), dtype=jnp.float32)
    v2 = jax.random.normal(ks[5], (B2, Lk2, Dv2), dtype=jnp.float32)

    out2 = jax.block_until_ready(
        scaled_dot_product_attention(q2, k2, v2, temperature2))
    ref2 = _reference(q2, k2, v2, temperature2)
    assert out2.shape == (B2, Lq2, Dv2)
    assert jnp.allclose(out2, ref2, atol=1e-4, rtol=1e-4), "mismatch (tiled)"

    # 3) bf16 compute path (v6e/v7x MXU-friendly); f32 accumulation inside.
    B3, Lq3, Lk3, D3, Dv3 = 2, 128, 384, 64, 64
    temperature3 = float(D3) ** 0.5
    q3 = jax.random.normal(ks[6], (B3, Lq3, D3), dtype=jnp.float32)
    k3 = jax.random.normal(ks[7], (B3, Lk3, D3), dtype=jnp.float32)
    v3 = jax.random.normal(ks[8], (B3, Lk3, Dv3), dtype=jnp.float32)

    out3 = jax.block_until_ready(
        scaled_dot_product_attention(q3, k3, v3, temperature3,
                                     compute_dtype=jnp.bfloat16))
    ref3 = _reference(q3, k3, v3, temperature3)
    assert out3.shape == (B3, Lq3, Dv3)
    assert jnp.allclose(out3.astype(jnp.float32), ref3, atol=4e-2, rtol=4e-2), \
        "mismatch (bf16)"

    print("KERNEL_OK")
</pallas_src>

<mosaic_0001>
module attributes {stable_mosaic.version = 11 : i64} {
  func.func @_flash_sdpa_kernel(%arg0: i32, %arg1: i32, %arg2: i32, %arg3: memref<1x8x32xf32, #tpu.memory_space<vmem>>, %arg4: memref<1x8x32xf32, #tpu.memory_space<vmem>>, %arg5: memref<1x8x32xf32, #tpu.memory_space<vmem>>, %arg6: memref<1x8x32xf32, #tpu.memory_space<vmem>>, %arg7: memref<8x32xf32, #tpu.memory_space<vmem>>, %arg8: memref<8x1xf32, #tpu.memory_space<vmem>>, %arg9: memref<8x1xf32, #tpu.memory_space<vmem>>, %arg10: memref<8x32xf32, #tpu.memory_space<vmem>>) attributes {dimension_semantics = [#tpu.dimension_semantics<parallel>, #tpu.dimension_semantics<parallel>, #tpu.dimension_semantics<arbitrary>], iteration_bounds = array<i64: 2, 1, 1>, scalar_prefetch = 0 : i64, scratch_operands = 4 : i64, tpu.core_type = #tpu.core_type<tc>, window_params = [{transform_indices = @transform_0, window_bounds = array<i64: 1, 8, 32>}, {transform_indices = @transform_1, window_bounds = array<i64: 1, 8, 32>}, {transform_indices = @transform_2, window_bounds = array<i64: 1, 8, 32>}, {transform_indices = @transform_3, window_bounds = array<i64: 1, 8, 32>}]} {
    %c0_i32 = arith.constant 0 : i32
    %0 = arith.cmpi eq, %arg2, %c0_i32 : i32
    %1 = arith.extui %0 : i1 to i32
    %c0_i32_0 = arith.constant 0 : i32
    %2 = arith.cmpi ne, %1, %c0_i32_0 : i32
    scf.if %2 {
      %c0_25 = arith.constant 0 : index
      %c0_26 = arith.constant 0 : index
      %c0_27 = arith.constant 0 : index
      %34 = vector.load %arg3[%c0_25, %c0_26, %c0_27] : memref<1x8x32xf32, #tpu.memory_space<vmem>>, vector<1x8x32xf32>
      %35 = vector.shape_cast %34 : vector<1x8x32xf32> to vector<8x32xf32>
      %cst_28 = arith.constant 0.176776692 : f32
      %36 = vector.broadcast %cst_28 : f32 to vector<8x32xf32>
      %37 = arith.mulf %35, %36 : vector<8x32xf32>
      %c0_29 = arith.constant 0 : index
      %c0_30 = arith.constant 0 : index
      %38 = vector.load %arg7[%c0_29, %c0_30] : memref<8x32xf32, #tpu.memory_space<vmem>>, vector<8x32xf32>
      tpu.vector_store %arg7[%c0_29, %c0_30], %37 {strides = array<i32>} : memref<8x32xf32, #tpu.memory_space<vmem>>, vector<8x32xf32>,
      %cst_31 = arith.constant 0xFF800000 : f32
      %39 = vector.broadcast %cst_31 : f32 to vector<8x1xf32>
      %c0_32 = arith.constant 0 : index
      %c0_33 = arith.constant 0 : index
      %40 = vector.load %arg8[%c0_32, %c0_33] : memref<8x1xf32, #tpu.memory_space<vmem>>, vector<8x1xf32>
      tpu.vector_store %arg8[%c0_32, %c0_33], %39 {strides = array<i32>} : memref<8x1xf32, #tpu.memory_space<vmem>>, vector<8x1xf32>,
      %cst_34 = arith.constant 0.000000e+00 : f32
      %41 = vector.broadcast %cst_34 : f32 to vector<8x1xf32>
      %c0_35 = arith.constant 0 : index
      %c0_36 = arith.constant 0 : index
      %42 = vector.load %arg9[%c0_35, %c0_36] : memref<8x1xf32, #tpu.memory_space<vmem>>, vector<8x1xf32>
      tpu.vector_store %arg9[%c0_35, %c0_36], %41 {strides = array<i32>} : memref<8x1xf32, #tpu.memory_space<vmem>>, vector<8x1xf32>,
      %cst_37 = arith.constant 0.000000e+00 : f32
      %43 = vector.broadcast %cst_37 : f32 to vector<8x32xf32>
      %c0_38 = arith.constant 0 : index
      %c0_39 = arith.constant 0 : index
      %44 = vector.load %arg10[%c0_38, %c0_39] : memref<8x32xf32, #tpu.memory_space<vmem>>, vector<8x32xf32>
      tpu.vector_store %arg10[%c0_38, %c0_39], %43 {strides = array<i32>} : memref<8x32xf32, #tpu.memory_space<vmem>>, vector<8x32xf32>,
    } else {
    }
    %c0 = arith.constant 0 : index
    %c0_1 = arith.constant 0 : index
    %3 = vector.load %arg7[%c0, %c0_1] : memref<8x32xf32, #tpu.memory_space<vmem>>, vector<8x32xf32>
    %c0_2 = arith.constant 0 : index
    %c0_3 = arith.constant 0 : index
    %c0_4 = arith.constant 0 : index
    %4 = vector.load %arg4[%c0_2, %c0_3, %c0_4] : memref<1x8x32xf32, #tpu.memory_space<vmem>>, vector<1x8x32xf32>
    %5 = vector.shape_cast %4 : vector<1x8x32xf32> to vector<8x32xf32>
    %cst = arith.constant dense<0.000000e+00> : vector<8x8xf32>
    %6 = tpu.matmul %3, %5, %cst {dimension_numbers = #tpu.dot_dimension_numbers<[1], [1], [0], [0], [0, 0, 1, 0], [], []>} : vector<8x32xf32>, vector<8x32xf32>, vector<8x8xf32> -> vector<8x8xf32>
    %c0_5 = arith.constant 0 : index
    %c0_6 = arith.constant 0 : index
    %7 = vector.load %arg8[%c0_5, %c0_6] : memref<8x1xf32, #tpu.memory_space<vmem>>, vector<8x1xf32>
    %cst_7 = arith.constant dense<0xFF800000> : vector<8xf32>
    %8 = vector.multi_reduction <maximumf>, %6, %cst_7 [1] : vector<8x8xf32> to vector<8xf32>
    %9 = vector.shape_cast %8 : vector<8xf32> to vector<8x1xf32>
    %10 = arith.maximumf %7, %9 : vector<8x1xf32>
    %11 = arith.subf %7, %10 : vector<8x1xf32>
    %12 = math.exp %11 : vector<8x1xf32>
    %13 = vector.broadcast %10 : vector<8x1xf32> to vector<8x8xf32>
    %14 = arith.subf %6, %13 : vector<8x8xf32>
    %15 = math.exp %14 : vector<8x8xf32>
    %c0_8 = arith.constant 0 : index
    %c0_9 = arith.constant 0 : index
    %16 = vector.load %arg9[%c0_8, %c0_9] : memref<8x1xf32, #tpu.memory_space<vmem>>, vector<8x1xf32>
    %17 = arith.mulf %12, %16 : vector<8x1xf32>
    %cst_10 = arith.constant dense<0.000000e+00> : vector<8xf32>
    %18 = vector.multi_reduction <add>, %15, %cst_10 [1] : vector<8x8xf32> to vector<8xf32>
    %19 = vector.shape_cast %18 : vector<8xf32> to vector<8x1xf32>
    %20 = arith.addf %17, %19 : vector<8x1xf32>
    %c0_11 = arith.constant 0 : index
    %c0_12 = arith.constant 0 : index
    %21 = vector.load %arg9[%c0_11, %c0_12] : memref<8x1xf32, #tpu.memory_space<vmem>>, vector<8x1xf32>
    tpu.vector_store %arg9[%c0_11, %c0_12], %20 {strides = array<i32>} : memref<8x1xf32, #tpu.memory_space<vmem>>, vector<8x1xf32>,
    %c0_13 = arith.constant 0 : index
    %c0_14 = arith.constant 0 : index
    %22 = vector.load %arg10[%c0_13, %c0_14] : memref<8x32xf32, #tpu.memory_space<vmem>>, vector<8x32xf32>
    %23 = vector.broadcast %12 : vector<8x1xf32> to vector<8x32xf32>
    %24 = arith.mulf %23, %22 : vector<8x32xf32>
    %c0_15 = arith.constant 0 : index
    %c0_16 = arith.constant 0 : index
    %c0_17 = arith.constant 0 : index
    %25 = vector.load %arg5[%c0_15, %c0_16, %c0_17] : memref<1x8x32xf32, #tpu.memory_space<vmem>>, vector<1x8x32xf32>
    %26 = vector.shape_cast %25 : vector<1x8x32xf32> to vector<8x32xf32>
    %cst_18 = arith.constant dense<0.000000e+00> : vector<8x32xf32>
    %27 = tpu.matmul %15, %26, %cst_18 {dimension_numbers = #tpu.dot_dimension_numbers<[1], [0], [0], [1], [0, 0, 1, 1], [], []>} : vector<8x8xf32>, vector<8x32xf32>, vector<8x32xf32> -> vector<8x32xf32>
    %28 = arith.addf %24, %27 : vector<8x32xf32>
    %c0_19 = arith.constant 0 : index
    %c0_20 = arith.constant 0 : index
    %29 = vector.load %arg10[%c0_19, %c0_20] : memref<8x32xf32, #tpu.memory_space<vmem>>, vector<8x32xf32>
    tpu.vector_store %arg10[%c0_19, %c0_20], %28 {strides = array<i32>} : memref<8x32xf32, #tpu.memory_space<vmem>>, vector<8x32xf32>,
    %c0_21 = arith.constant 0 : index
    %c0_22 = arith.constant 0 : index
    %30 = vector.load %arg8[%c0_21, %c0_22] : memref<8x1xf32, #tpu.memory_space<vmem>>, vector<8x1xf32>
    tpu.vector_store %arg8[%c0_21, %c0_22], %10 {strides = array<i32>} : memref<8x1xf32, #tpu.memory_space<vmem>>, vector<8x1xf32>,
    %c0_i32_23 = arith.constant 0 : i32
    %31 = arith.cmpi eq, %arg2, %c0_i32_23 : i32
    %32 = arith.extui %31 : i1 to i32
    %c0_i32_24 = arith.constant 0 : i32
    %33 = arith.cmpi ne, %32, %c0_i32_24 : i32
    scf.if %33 {
      %c0_25 = arith.constant 0 : index
      %c0_26 = arith.constant 0 : index
      %34 = vector.load %arg9[%c0_25, %c0_26] : memref<8x1xf32, #tpu.memory_space<vmem>>, vector<8x1xf32>
      %35 = tpu.reciprocal %34 {approx = true} : vector<8x1xf32> -> vector<8x1xf32>
      %36 = arith.mulf %34, %35 : vector<8x1xf32>
      %cst_27 = arith.constant 2.000000e+00 : f32
      %37 = vector.broadcast %cst_27 : f32 to vector<8x1xf32>
      %38 = arith.subf %37, %36 : vector<8x1xf32>
      %39 = arith.mulf %35, %38 : vector<8x1xf32>
      %c0_28 = arith.constant 0 : index
      %c0_29 = arith.constant 0 : index
      %40 = vector.load %arg10[%c0_28, %c0_29] : memref<8x32xf32, #tpu.memory_space<vmem>>, vector<8x32xf32>
      %41 = vector.broadcast %39 : vector<8x1xf32> to vector<8x32xf32>
      %42 = arith.mulf %40, %41 : vector<8x32xf32>
      %c0_30 = arith.constant 0 : index
      %c0_31 = arith.constant 0 : index
      %c0_32 = arith.constant 0 : index
      %43 = vector.load %arg6[%c0_30, %c0_31, %c0_32] : memref<1x8x32xf32, #tpu.memory_space<vmem>>, vector<1x8x32xf32>
      %44 = vector.shape_cast %43 : vector<1x8x32xf32> to vector<8x32xf32>
      %45 = vector.shape_cast %42 : vector<8x32xf32> to vector<1x8x32xf32>
      tpu.vector_store %arg6[%c0_30, %c0_31, %c0_32], %45 {strides = array<i32>} : memref<1x8x32xf32, #tpu.memory_space<vmem>>, vector<1x8x32xf32>,
    } else {
    }
    return
  }
  func.func @transform_0(%arg0: i32, %arg1: i32, %arg2: i32) -> (i32, i32, i32) {
    %c0_i32 = arith.constant 0 : i32
    %c0_i32_0 = arith.constant 0 : i32
    return %arg0, %arg1, %c0_i32 : i32, i32, i32
  }
  func.func @transform_1(%arg0: i32, %arg1: i32, %arg2: i32) -> (i32, i32, i32) {
    %c0_i32 = arith.constant 0 : i32
    %c0_i32_0 = arith.constant 0 : i32
    return %arg0, %arg2, %c0_i32 : i32, i32, i32
  }
  func.func @transform_2(%arg0: i32, %arg1: i32, %arg2: i32) -> (i32, i32, i32) {
    %c0_i32 = arith.constant 0 : i32
    %c0_i32_0 = arith.constant 0 : i32
    return %arg0, %arg2, %c0_i32 : i32, i32, i32
  }
  func.func @transform_3(%arg0: i32, %arg1: i32, %arg2: i32) -> (i32, i32, i32) {
    %c0_i32 = arith.constant 0 : i32
    %c0_i32_0 = arith.constant 0 : i32
    return %arg0, %arg1, %c0_i32 : i32, i32, i32
  }
}

</mosaic_0001>

<llo_original>
// kernel: tpu_custom_call.1
$region0: #{tpu_custom_call.1}
  #allocation0 [shape = 'u32[]', space=smem, size = 0x4, offset = 0x4, fixed_abs, tag = 'smem constant byte address 0x4 - core index']
  #allocation1 [shape = 'u32[144,128]{1,0:T(1,128)}', space=vmem, size = 0x12000, scoped, tag = 'internal scratch']
  #allocation2 [shape = 'f32[8,32]{1,0:T(8,128)}', space=vmem, size = 0x1000, scoped, tag = 'scratch operand']
  #allocation3 [shape = 'f32[8,1]{1,0:T(8,128)}', space=vmem, size = 0x1000, scoped, tag = 'scratch operand']
  #allocation4 [shape = 'f32[8,1]{1,0:T(8,128)}', space=vmem, size = 0x1000, scoped, tag = 'scratch operand']
  #allocation5 [shape = 'f32[8,32]{1,0:T(8,128)}', space=vmem, size = 0x1000, scoped, tag = 'scratch operand']
  %s0 = inlined_call_operand.hbm [shape: f32[2,8,32], index: 0, kind: input, shape index: {}]
  %s1 = inlined_call_operand.hbm [shape: f32[2,8,32], index: 1, kind: input, shape index: {}]
  %s2 = inlined_call_operand.hbm [shape: f32[2,8,32], index: 2, kind: input, shape index: {}]
  %s3 = inlined_call_operand.hbm [shape: f32[2,8,32], index: 3, kind: output, shape index: {}]
  %s4 = sld [smem:[#allocation0]]
  $region65: #{tpu_custom_call.1} parent=0
    _
  %s6 = ssub.s32 1, %s4
  %s7 = scalar_select 0, %s6, %s4
  $region1: #{tpu_custom_call.1} parent=0
    #allocation6 [shape = 'u8[8192]{0}', space=vmem, size = 0x2000, scoped, tag = 'input window, operand 0']
    #allocation7 [shape = 's32[2]{0}', space=sflag, size = 0x8, scoped, tag = 'scoped memory for tpu_custom_call.1']
    #allocation8 [shape = 's32[2]{0}', space=sflag, size = 0x8, scoped, tag = 'scoped memory for tpu_custom_call.1']
    #allocation9 [shape = 'u8[8192]{0}', space=vmem, size = 0x2000, scoped, tag = 'input window, operand 1']
    #allocation10 [shape = 's32[2]{0}', space=sflag, size = 0x8, scoped, tag = 'scoped memory for tpu_custom_call.1']
    #allocation11 [shape = 'u8[8192]{0}', space=vmem, size = 0x2000, scoped, tag = 'input window, operand 2']
    #allocation12 [shape = 'u8[8192]{0}', space=vmem, size = 0x2000, scoped, tag = 'output window, operand 0']
    %8 = vsyncpa [#allocation7], 0
    %s9 = scalar_lea.sflag [#allocation7], 1
    %10 = vsyncpa %s9, 0
    %11 = vsyncpa [#allocation10], 0
    %s12 = scalar_lea.sflag [#allocation10], 1
    %13 = vsyncpa %s12, 0
    %14 = vsyncpa [#allocation8], 0
    %s15 = scalar_lea.sflag [#allocation8], 1
    %16 = vsyncpa %s15, 0
    loop: start=0, step=1, limit=4
    $region2: #{tpu_custom_call.1} parent=1 // loop_pre_header
      _
    $region3: #{tpu_custom_call.1} parent=1 // loop_header
      %s18 = sphi 0, %s22
      %p19 = scmp.ge.s32.totalorder %s18, 4
      %s25 = sphi 0, %s44
      %s26 = sphi 0, %s40
      %s27 = sphi 0, %s36
      %s28 = sphi 0, %s25
      %s29 = sphi 0, %s26
      %s30 = sphi 0, %s27
      %s31 = sphi 0, %s28
      %s32 = sphi 0, %s29
      %s33 = sphi 0, %s30
      %s49 = sphi 0, %s51
      %s52 = sphi 0, %s49
      %s53 = sphi 0, %s52
      %s69 = sphi 0, %s53
      %s77 = sphi 0, %s79
      %s80 = sphi 0, %s77
      %s81 = sphi 0, %s80
      %s97 = sphi 0, %s81
      %s105 = sphi 0, %s107
      %s108 = sphi 0, %s105
      %s109 = sphi 0, %s108
      %s125 = sphi 0, %s109
      %s133 = sphi 0, %s135
      %s136 = sphi 0, %s133
      %s137 = sphi 0, %s136
      %s153 = sphi 0, %s137
    $region4: #{tpu_custom_call.1} parent=1 // loop_header_branch
      %21 = sbr.rel (%p19) target = $region8
    $region5: #{tpu_custom_call.1} parent=1 // loop_body
      %s23 = ssub.s32 %s18, 1
      %s24 = ssub.s32 %s18, 2
      %s34 = sadd.s32 1, %s27
      %p35 = scmp.ge.s32.totalorder %s34, 1
      %s36 = scalar_select %p35, 0, %s34
      %s37 = sadd.s32 1, %s26
      %s38 = scalar_select %p35, %s37, %s26
      %p39 = scmp.ge.s32.totalorder %s38, 1
      %s40 = scalar_select %p39, 0, %s38
      %s41 = sadd.s32 1, %s25
      %s42 = scalar_select %p39, %s41, %s25
      %p43 = scmp.ge.s32.totalorder %s42, 2
      %s44 = scalar_select %p43, 0, %s42
      %s45 = ssub.s32 %s25, %s44
      %s46 = ssub.s32 %s26, %s40
      %s47 = sor.u32 %s45, %s46
      %p48 = scmp.eq.s32.totalorder %s47, 0
      %s50 = sadd.s32 %s49, 1
      %s51 = scalar_select %p48, %s49, %s50
      %p54 = pneg %p48
      %p55 = scmp.eq.s32.totalorder %s18, 1
      %p56 = por %p54, %p55
      %p57 = scmp.ne.s32.totalorder %s49, %s52
      %p58 = scmp.eq.s32.totalorder %s18, 0
      %p59 = por %p57, %p58
      %p60 = scmp.ne.s32.totalorder %s49, %s52
      %p61 = scmp.eq.s32.totalorder %s23, 1
      %p62 = por %p60, %p61
      %p63 = scmp.ne.s32.totalorder %s52, %s53
      %p64 = scmp.eq.s32.totalorder %s23, 0
      %p65 = por %p63, %p64
      %p66 = scmp.ne.s32.totalorder %s52, %s53
      %p67 = scmp.eq.s32.totalorder %s24, 1
      %p68 = por %p66, %p67
      %p70 = scmp.ne.s32.totalorder %s53, %s69
      %p71 = scmp.eq.s32.totalorder %s24, 0
      %p72 = por %p70, %p71
      %s73 = ssub.s32 %s25, %s44
      %s74 = ssub.s32 %s27, %s36
      %s75 = sor.u32 %s73, %s74
      %p76 = scmp.eq.s32.totalorder %s75, 0
      %s78 = sadd.s32 %s77, 1
      %s79 = scalar_select %p76, %s77, %s78
      %p82 = pneg %p76
      %p83 = scmp.eq.s32.totalorder %s18, 1
      %p84 = por %p82, %p83
      %p85 = scmp.ne.s32.totalorder %s77, %s80
      %p86 = scmp.eq.s32.totalorder %s18, 0
      %p87 = por %p85, %p86
      %p88 = scmp.ne.s32.totalorder %s77, %s80
      %p89 = scmp.eq.s32.totalorder %s23, 1
      %p90 = por %p88, %p89
      %p91 = scmp.ne.s32.totalorder %s80, %s81
      %p92 = scmp.eq.s32.totalorder %s23, 0
      %p93 = por %p91, %p92
      %p94 = scmp.ne.s32.totalorder %s80, %s81
      %p95 = scmp.eq.s32.totalorder %s24, 1
      %p96 = por %p94, %p95
      %p98 = scmp.ne.s32.totalorder %s81, %s97
      %p99 = scmp.eq.s32.totalorder %s24, 0
      %p100 = por %p98, %p99
      %s101 = ssub.s32 %s25, %s44
      %s102 = ssub.s32 %s27, %s36
      %s103 = sor.u32 %s101, %s102
      %p104 = scmp.eq.s32.totalorder %s103, 0
      %s106 = sadd.s32 %s105, 1
      %s107 = scalar_select %p104, %s105, %s106
      %p110 = pneg %p104
      %p111 = scmp.eq.s32.totalorder %s18, 1
      %p112 = por %p110, %p111
      %p113 = scmp.ne.s32.totalorder %s105, %s108
      %p114 = scmp.eq.s32.totalorder %s18, 0
      %p115 = por %p113, %p114
      %p116 = scmp.ne.s32.totalorder %s105, %s108
      %p117 = scmp.eq.s32.totalorder %s23, 1
      %p118 = por %p116, %p117
      %p119 = scmp.ne.s32.totalorder %s108, %s109
      %p120 = scmp.eq.s32.totalorder %s23, 0
      %p121 = por %p119, %p120
      %p122 = scmp.ne.s32.totalorder %s108, %s109
      %p123 = scmp.eq.s32.totalorder %s24, 1
      %p124 = por %p122, %p123
      %p126 = scmp.ne.s32.totalorder %s109, %s125
      %p127 = scmp.eq.s32.totalorder %s24, 0
      %p128 = por %p126, %p127
      %s129 = ssub.s32 %s25, %s44
      %s130 = ssub.s32 %s26, %s40
      %s131 = sor.u32 %s129, %s130
      %p132 = scmp.eq.s32.totalorder %s131, 0
      %s134 = sadd.s32 %s133, 1
      %s135 = scalar_select %p132, %s133, %s134
      %p138 = pneg %p132
      %p139 = scmp.eq.s32.totalorder %s18, 1
      %p140 = por %p138, %p139
      %p141 = scmp.ne.s32.totalorder %s133, %s136
      %p142 = scmp.eq.s32.totalorder %s18, 0
      %p143 = por %p141, %p142
      %p144 = scmp.ne.s32.totalorder %s133, %s136
      %p145 = scmp.eq.s32.totalorder %s23, 1
      %p146 = por %p144, %p145
      %p147 = scmp.ne.s32.totalorder %s136, %s137
      %p148 = scmp.eq.s32.totalorder %s23, 0
      %p149 = por %p147, %p148
      %p150 = scmp.ne.s32.totalorder %s136, %s137
      %p151 = scmp.eq.s32.totalorder %s24, 1
      %p152 = por %p150, %p151
      %p154 = scmp.ne.s32.totalorder %s137, %s153
      %p155 = scmp.eq.s32.totalorder %s24, 0
      %p156 = por %p154, %p155
      %p157 = scmp.le.s32.totalorder 1, %s18
      %p158 = scmp.lt.s32.totalorder %s18, 3
      %p159 = pnand %p157, %p158
      %p160 = pneg %p159
      // Predicated region
      $region9: #{tpu_custom_call.1} parent=5 // pred_check
        _
      $region10: #{tpu_custom_call.1} parent=5 // pred_check_branch
        %162 = sbr.rel (%p159) target = $region12
      $region11: #{tpu_custom_call.1} parent=5 // pred_region
        %s163 = ssub.s32 %s18, 1
      $region12: #{tpu_custom_call.1} parent=5 // pred_fallthru
        _
      %p164 = scmp.lt.s32.totalorder %s18, 2
      // Predicated region
      $region13: #{tpu_custom_call.1} parent=5 // pred_check
        %p165 = pneg %p164
      $region14: #{tpu_custom_call.1} parent=5 // pred_check_branch
        %167 = sbr.rel (%p165) target = $region16
      $region15: #{tpu_custom_call.1} parent=5 // pred_region
        // Predicated region
        $region17: #{tpu_custom_call.1} parent=15 // pred_check
          %p168 = pneg %p59
        $region18: #{tpu_custom_call.1} parent=15 // pred_check_branch
          %170 = sbr.rel (%p168) target = $region20
        $region19: #{tpu_custom_call.1} parent=15 // pred_region
          %s171 = sand.u32 %s49, 1
          %s172 = scalar_lea.sflag [#allocation7], %s171
          %s173 = sand.u32 %s49, 1
          %s174 = smul.addr %s173, 8
          %s175 = scalar_lea.vmem [#allocation6], %s174
          %s177 = ssub.s32 128, 128
          %178 = vsyncadd %s172, %s177
          %s179 = sadd.s32 %s26, %s25
          %s180 = smul.addr %s179, 128
          %s181 = scalar_lea.hbm %s0, %s180
          %s183 = sshll.u32 %s175, 4
          %s184 = int_to_ptr.vmem [resolvable:$true] %s183
          %186 = dma.hbm_to_vmem [thread:$0]  %s181, 128, %s184, %s172
        $region20: #{tpu_custom_call.1} parent=15 // pred_fallthru
          _
        // Predicated region
        $region21: #{tpu_custom_call.1} parent=15 // pred_check
          %p187 = pneg %p87
        $region22: #{tpu_custom_call.1} parent=15 // pred_check_branch
          %189 = sbr.rel (%p187) target = $region24
        $region23: #{tpu_custom_call.1} parent=15 // pred_region
          %s190 = sand.u32 %s18, 1
          %s191 = scalar_lea.sflag [#allocation10], %s190
          %s192 = sand.u32 %s77, 1
          %s193 = smul.addr %s192, 8
          %s194 = scalar_lea.vmem [#allocation9], %s193
          %s196 = ssub.s32 128, 128
          %197 = vsyncadd %s191, %s196
          %s198 = sadd.s32 %s27, %s25
          %s199 = smul.addr %s198, 128
          %s200 = scalar_lea.hbm %s1, %s199
          %s202 = sshll.u32 %s194, 4
          %s203 = int_to_ptr.vmem [resolvable:$true] %s202
          %205 = dma.hbm_to_vmem [thread:$0]  %s200, 128, %s203, %s191
        $region24: #{tpu_custom_call.1} parent=15 // pred_fallthru
          _
        // Predicated region
        $region25: #{tpu_custom_call.1} parent=15 // pred_check
          %p206 = pneg %p115
        $region26: #{tpu_custom_call.1} parent=15 // pred_check_branch
          %208 = sbr.rel (%p206) target = $region28
        $region27: #{tpu_custom_call.1} parent=15 // pred_region
          %s209 = sand.u32 %s18, 1
          %s210 = scalar_lea.sflag [#allocation10], %s209
          %s211 = sand.u32 %s105, 1
          %s212 = smul.addr %s211, 8
          %s213 = scalar_lea.vmem [#allocation11], %s212
          %s215 = ssub.s32 128, 128
          %216 = vsyncadd %s210, %s215
          %s217 = sadd.s32 %s27, %s25
          %s218 = smul.addr %s217, 128
          %s219 = scalar_lea.hbm %s2, %s218
          %s221 = sshll.u32 %s213, 4
          %s222 = int_to_ptr.vmem [resolvable:$true] %s221
          %224 = dma.hbm_to_vmem [thread:$0]  %s219, 128, %s222, %s210
        $region28: #{tpu_custom_call.1} parent=15 // pred_fallthru
          _
      $region16: #{tpu_custom_call.1} parent=5 // pred_fallthru
        _
      %p225 = scmp.le.s32.totalorder 1, %s18
      %p226 = scmp.lt.s32.totalorder %s18, 3
      %p227 = pnand %p225, %p226
      %p228 = pneg %p227
      // Predicated region
      $region29: #{tpu_custom_call.1} parent=5 // pred_check
        _
      $region30: #{tpu_custom_call.1} parent=5 // pred_check_branch
        %230 = sbr.rel (%p227) target = $region32
      $region31: #{tpu_custom_call.1} parent=5 // pred_region
        %s231 = ssub.s32 %s18, 1
        %s232 = sand.u32 %s52, 1
        %s233 = scalar_lea.sflag [#allocation7], %s232
        %s234 = sand.u32 %s52, 1
        %s235 = smul.addr %s234, 8
        %s236 = scalar_lea.vmem [#allocation6], %s235
        // Predicated region
        $region33: #{tpu_custom_call.1} parent=31 // pred_check
          %p237 = pneg %p65
        $region34: #{tpu_custom_call.1} parent=31 // pred_check_branch
          %239 = sbr.rel (%p237) target = $region36
        $region35: #{tpu_custom_call.1} parent=31 // pred_region
          %240 = dma.done %s233, 128
        $region36: #{tpu_custom_call.1} parent=31 // pred_fallthru
          _
        %s241 = sand.u32 %s23, 1
        %s242 = scalar_lea.sflag [#allocation10], %s241
        %s243 = sand.u32 %s80, 1
        %s244 = smul.addr %s243, 8
        %s245 = scalar_lea.vmem [#allocation9], %s244
        // Predicated region
        $region37: #{tpu_custom_call.1} parent=31 // pred_check
          %p246 = pneg %p93
        $region38: #{tpu_custom_call.1} parent=31 // pred_check_branch
          %248 = sbr.rel (%p246) target = $region40
        $region39: #{tpu_custom_call.1} parent=31 // pred_region
          %249 = dma.done %s242, 128
        $region40: #{tpu_custom_call.1} parent=31 // pred_fallthru
          _
        %s250 = sand.u32 %s23, 1
        %s251 = scalar_lea.sflag [#allocation10], %s250
        %s252 = sand.u32 %s108, 1
        %s253 = smul.addr %s252, 8
        %s254 = scalar_lea.vmem [#allocation11], %s253
        // Predicated region
        $region41: #{tpu_custom_call.1} parent=31 // pred_check
          %p255 = pneg %p121
        $region42: #{tpu_custom_call.1} parent=31 // pred_check_branch
          %257 = sbr.rel (%p255) target = $region44
        $region43: #{tpu_custom_call.1} parent=31 // pred_region
          %258 = dma.done %s251, 128
        $region44: #{tpu_custom_call.1} parent=31 // pred_fallthru
          _
        %s259 = sand.u32 %s52, 1
        %s260 = scalar_lea.sflag [#allocation7], %s259
        %s261 = sand.u32 %s52, 1
        %s262 = smul.addr %s261, 8
        %s263 = scalar_lea.vmem [#allocation6], %s262
        %p264 = pneg %p65
        %p265 = pneg %p62
        %s266 = sand.u32 %s23, 1
        %s267 = scalar_lea.sflag [#allocation10], %s266
        %s268 = sand.u32 %s80, 1
        %s269 = smul.addr %s268, 8
        %s270 = scalar_lea.vmem [#allocation9], %s269
        %p271 = pneg %p93
        %p272 = pneg %p90
        %s273 = sand.u32 %s23, 1
        %s274 = scalar_lea.sflag [#allocation10], %s273
        %s275 = sand.u32 %s108, 1
        %s276 = smul.addr %s275, 8
        %s277 = scalar_lea.vmem [#allocation11], %s276
        %p278 = pneg %p121
        %p279 = pneg %p118
        %p280 = pneg %p149
        %p281 = pneg %p146
        %s282 = sand.u32 %s136, 1
        %s283 = scalar_lea.sflag [#allocation8], %s282
        %s284 = sand.u32 %s136, 1
        %s285 = smul.addr %s284, 8
        %s286 = scalar_lea.vmem [#allocation12], %s285
        %p287 = scmp.eq.s32.totalorder %s30, 0
        // Predicated region
        $region45: #{tpu_custom_call.1} parent=31 // pred_check
          %p288 = pneg %p287
        $region46: #{tpu_custom_call.1} parent=31 // pred_check_branch
          %290 = sbr.rel (%p288) target = $region48
        $region47: #{tpu_custom_call.1} parent=31 // pred_region
          %v291 = vld [vmem:[%s236] sm:$0xff]
          %v292 = vmul.f32 %v291, 0.17677669
          %vm293 = vcmask 261120
          %294 = vst.msk [vmem:[#allocation2] sm:$0xff] %vm293, %v292
          %vm295 = vcmask 7168
          %296 = vst.msk [vmem:[#allocation3] sm:$0xff] %vm295, -inf
          %297 = vst.msk [vmem:[#allocation4] sm:$0xff] %vm295, 0.0
          %298 = vst.msk [vmem:[#allocation5] sm:$0xff] %vm293, 0.0
        $region48: #{tpu_custom_call.1} parent=31 // pred_fallthru
          _
        %v299 = vld [vmem:[#allocation2] sm:$0xff]
        %v300 = vld [vmem:[%s245] sm:$0xff]
        %vm301 = vcmask 261120
        %v303 = vsel %vm301, %v299, 0
        %v306 = vsel %vm301, %v300, 0
        %308 = vmatprep.subr.mxu0 0.0
        %309 = vmatpush1.xpose.msra.mxu0 0.0
        %310 = vmatprep.subr.mxu0 0.0
        %311 = vmatpush1.xpose.msra.mxu0 0.0
        %312 = vmatprep.subr.mxu0 0.0
        %313 = vmatpush1.xpose.msra.mxu0 0.0
        %314 = vmatprep.subr.mxu0 0.0
        %315 = vmatpush1.xpose.msra.mxu0 0.0
        %316 = vmatprep.subr.mxu0 0.0
        %317 = vmatpush1.xpose.msra.mxu0 0.0
        %318 = vmatprep.subr.mxu0 0.0
        %319 = vmatpush1.xpose.msra.mxu0 0.0
        %320 = vmatprep.subr.mxu0 0.0
        %321 = vmatpush1.xpose.msra.mxu0 0.0
        %322 = vmatprep.subr.mxu0 0.0
        %323 = vmatpush1.xpose.msra.mxu0 0.0
        %324 = vmatprep.subr.mxu0 0.0
        %325 = vmatpush1.xpose.msra.mxu0 0.0
        %326 = vmatprep.subr.mxu0 0.0
        %327 = vmatpush1.xpose.msra.mxu0 0.0
        %328 = vmatprep.subr.mxu0 0.0
        %329 = vmatpush1.xpose.msra.mxu0 0.0
        %330 = vmatprep.subr.mxu0 0.0
        %331 = vmatpush1.xpose.msra.mxu0 0.0
        %332 = vmatprep.subr.mxu0 0.0
        %333 = vmatpush1.xpose.msra.mxu0 0.0
        %334 = vmatprep.subr.mxu0 0.0
        %335 = vmatpush1.xpose.msra.mxu0 0.0
        %336 = vmatprep.subr.mxu0 0.0
        %337 = vmatpush1.xpose.msra.mxu0 0.0
        %338 = vmatprep.subr.mxu0 0.0
        %339 = vmatpush1.xpose.msra.mxu0 %v306
        %340 = vmatprep.subr.mxu0 0.0
        %341 = vmatpush2.xpose.msra.mxu0 0.0
        %342 = vmatprep.subr.mxu0 0.0
        %343 = vmatpush2.xpose.msra.mxu0 0.0
        %344 = vmatprep.subr.mxu0 0.0
        %345 = vmatpush2.xpose.msra.mxu0 0.0
        %346 = vmatprep.subr.mxu0 0.0
        %347 = vmatpush2.xpose.msra.mxu0 0.0
        %348 = vmatprep.subr.mxu0 0.0
        %349 = vmatpush2.xpose.msra.mxu0 0.0
        %350 = vmatprep.subr.mxu0 0.0
        %351 = vmatpush2.xpose.msra.mxu0 0.0
        %352 = vmatprep.subr.mxu0 0.0
        %353 = vmatpush2.xpose.msra.mxu0 0.0
        %354 = vmatprep.subr.mxu0 0.0
        %355 = vmatpush2.xpose.msra.mxu0 0.0
        %356 = vmatprep.subr.mxu0 0.0
        %357 = vmatpush2.xpose.msra.mxu0 0.0
        %358 = vmatprep.subr.mxu0 0.0
        %359 = vmatpush2.xpose.msra.mxu0 0.0
        %360 = vmatprep.subr.mxu0 0.0
        %361 = vmatpush2.xpose.msra.mxu0 0.0
        %362 = vmatprep.subr.mxu0 0.0
        %363 = vmatpush2.xpose.msra.mxu0 0.0
        %364 = vmatprep.subr.mxu0 0.0
        %365 = vmatpush2.xpose.msra.mxu0 0.0
        %366 = vmatprep.subr.mxu0 0.0
        %367 = vmatpush2.xpose.msra.mxu0 0.0
        %368 = vmatprep.subr.mxu0 0.0
        %369 = vmatpush2.xpose.msra.mxu0 0.0
        %370 = vmatprep.subr.mxu0 0.0
        %371 = vmatpush2.xpose.msra.mxu0 0.0
        %372 = vmatprep.mubr.f32.mxu0 0.0
        %373 = vmatmul.mubr.f32.gmra.mxu0 %v303
        %v374 = vpop.f32.mrf.mxu0
        %v375 = vadd.f32 0.0, %v374
        %v376 = vpop.f32.mrf.mxu0
        %377 = vdwg.mxu0
        %v378 = vld [vmem:[#allocation3] sm:$0xff]
        %vm379 = vcmask 64512
        %v380 = vsel %vm379, %v375, -inf
        %381 = vmax.xlane.f32.xlu0 %v380
        %v382 = vpop.xlane.xlu0 %381
        %v383 = vmax.f32 %v378, %v382
        %v384 = vsub.f32 %v378, %v383
        %v385 = vmul.f32 %v384, 1.442695
        %v386 = vpow.pop %v385
        %388 = vset.pattern.permute.xlu0 0
        %389 = vperm.xlu0 %388, %v383
        %v390 = vpop.permute.xlu0 %389
        %v392 = vsub.f32 %v375, %v390
        %v393 = vmul.f32 %v392, 1.442695
        %v394 = vpow.pop %v393
        %v395 = vld [vmem:[#allocation4] sm:$0xff]
        %v396 = vmul.f32 %v386, %v395
        %v397 = vsel %vm379, %v394, 0.0
        %398 = vadd.xlane.f32.xlu0 %v397
        %v399 = vpop.xlane.xlu0 %398
        %v400 = vadd.f32 %v396, %v399
        %vm401 = vcmask 7168
        %402 = vst.msk [vmem:[#allocation4] sm:$0xff] %vm401, %v400
        %v403 = vld [vmem:[#allocation5] sm:$0xff]
        %405 = vset.pattern.permute.xlu0 0
        %406 = vperm.xlu0 %405, %v386
        %v407 = vpop.permute.xlu0 %406
        %v409 = vmul.f32 %v407, %v403
        %v410 = vld [vmem:[%s254] sm:$0xff]
        %v412 = vsel %vm379, %v394, 0
        %414 = vmatprep.subr.mxu0 0.0
        %415 = vmatpush1.msra.mxu0 0.0
        %416 = vmatprep.subr.mxu0 0.0
        %417 = vmatpush1.msra.mxu0 0.0
        %418 = vmatprep.subr.mxu0 0.0
        %419 = vmatpush1.msra.mxu0 0.0
        %420 = vmatprep.subr.mxu0 0.0
        %421 = vmatpush1.msra.mxu0 0.0
        %422 = vmatprep.subr.mxu0 0.0
        %423 = vmatpush1.msra.mxu0 0.0
        %424 = vmatprep.subr.mxu0 0.0
        %425 = vmatpush1.msra.mxu0 0.0
        %426 = vmatprep.subr.mxu0 0.0
        %427 = vmatpush1.msra.mxu0 0.0
        %428 = vmatprep.subr.mxu0 0.0
        %429 = vmatpush1.msra.mxu0 0.0
        %430 = vmatprep.subr.mxu0 0.0
        %431 = vmatpush1.msra.mxu0 0.0
        %432 = vmatprep.subr.mxu0 0.0
        %433 = vmatpush1.msra.mxu0 0.0
        %434 = vmatprep.subr.mxu0 0.0
        %435 = vmatpush1.msra.mxu0 0.0
        %436 = vmatprep.subr.mxu0 0.0
        %437 = vmatpush1.msra.mxu0 0.0
        %438 = vmatprep.subr.mxu0 0.0
        %439 = vmatpush1.msra.mxu0 0.0
        %440 = vmatprep.subr.mxu0 0.0
        %441 = vmatpush1.msra.mxu0 0.0
        %442 = vmatprep.subr.mxu0 0.0
        %443 = vmatpush1.msra.mxu0 0.0
        %444 = vmatprep.subr.mxu0 0.0
        %445 = vmatpush1.msra.mxu0 %v410
        %446 = vmatprep.subr.mxu0 0.0
        %447 = vmatpush2.msra.mxu0 0.0
        %448 = vmatprep.subr.mxu0 0.0
        %449 = vmatpush2.msra.mxu0 0.0
        %450 = vmatprep.subr.mxu0 0.0
        %451 = vmatpush2.msra.mxu0 0.0
        %452 = vmatprep.subr.mxu0 0.0
        %453 = vmatpush2.msra.mxu0 0.0
        %454 = vmatprep.subr.mxu0 0.0
        %455 = vmatpush2.msra.mxu0 0.0
        %456 = vmatprep.subr.mxu0 0.0
        %457 = vmatpush2.msra.mxu0 0.0
        %458 = vmatprep.subr.mxu0 0.0
        %459 = vmatpush2.msra.mxu0 0.0
        %460 = vmatprep.subr.mxu0 0.0
        %461 = vmatpush2.msra.mxu0 0.0
        %462 = vmatprep.subr.mxu0 0.0
        %463 = vmatpush2.msra.mxu0 0.0
        %464 = vmatprep.subr.mxu0 0.0
        %465 = vmatpush2.msra.mxu0 0.0
        %466 = vmatprep.subr.mxu0 0.0
        %467 = vmatpush2.msra.mxu0 0.0
        %468 = vmatprep.subr.mxu0 0.0
        %469 = vmatpush2.msra.mxu0 0.0
        %470 = vmatprep.subr.mxu0 0.0
        %471 = vmatpush2.msra.mxu0 0.0
        %472 = vmatprep.subr.mxu0 0.0
        %473 = vmatpush2.msra.mxu0 0.0
        %474 = vmatprep.subr.mxu0 0.0
        %475 = vmatpush2.msra.mxu0 0.0
        %476 = vmatprep.subr.mxu0 0.0
        %477 = vmatpush2.msra.mxu0 0.0
        %478 = vmatprep.mubr.f32.mxu0 0.0
        %479 = vmatmul.mubr.f32.gmra.mxu0 %v412
        %v480 = vpop.f32.mrf.mxu0
        %v481 = vadd.f32 0.0, %v480
        %v482 = vpop.f32.mrf.mxu0
        %483 = vdwg.mxu0
        %v484 = vadd.f32 %v409, %v481
        %485 = vst.msk [vmem:[#allocation5] sm:$0xff] %vm301, %v484
        %486 = vst.msk [vmem:[#allocation3] sm:$0xff] %vm401, %v383
        // Predicated region
        $region49: #{tpu_custom_call.1} parent=31 // pred_check
          %p487 = pneg %p287
        $region50: #{tpu_custom_call.1} parent=31 // pred_check_branch
          %489 = sbr.rel (%p487) target = $region52
        $region51: #{tpu_custom_call.1} parent=31 // pred_region
          %v490 = vld [vmem:[#allocation4] sm:$0xff]
          %v491 = vrcp.pop %v490
          %v492 = vmul.f32 %v490, %v491
          %v493 = vsub.f32 2.0, %v492
          %v494 = vmul.f32 %v491, %v493
          %v495 = vld [vmem:[#allocation5] sm:$0xff]
          %497 = vset.pattern.permute.xlu0 0
          %498 = vperm.xlu0 %497, %v494
          %v499 = vpop.permute.xlu0 %498
          %v501 = vmul.f32 %v495, %v499
          %502 = vst.msk [vmem:[%s286] sm:$0xff] %vm301, %v501
        $region52: #{tpu_custom_call.1} parent=31 // pred_fallthru
          _
        %s503 = sand.u32 %s136, 1
        %s504 = scalar_lea.sflag [#allocation8], %s503
        %s505 = sand.u32 %s136, 1
        %s506 = smul.addr %s505, 8
        %s507 = scalar_lea.vmem [#allocation12], %s506
        // Predicated region
        $region53: #{tpu_custom_call.1} parent=31 // pred_check
          %p508 = pneg %p146
        $region54: #{tpu_custom_call.1} parent=31 // pred_check_branch
          %510 = sbr.rel (%p508) target = $region56
        $region55: #{tpu_custom_call.1} parent=31 // pred_region
          %s512 = ssub.s32 128, 128
          %513 = vsyncadd %s504, %s512
          %s514 = sadd.s32 %s29, %s28
          %s515 = smul.addr %s514, 128
          %s516 = scalar_lea.hbm %s3, %s515
          %s518 = sshll.u32 %s507, 4
          %s519 = int_to_ptr.vmem [resolvable:$true] %s518
          %521 = dma.vmem_to_hbm [thread:$0]  %s519, 128, %s516, %s504
        $region56: #{tpu_custom_call.1} parent=31 // pred_fallthru
          _
      $region32: #{tpu_custom_call.1} parent=5 // pred_fallthru
        _
      %p522 = scmp.le.s32.totalorder 2, %s18
      // Predicated region
      $region57: #{tpu_custom_call.1} parent=5 // pred_check
        %p523 = pneg %p522
      $region58: #{tpu_custom_call.1} parent=5 // pred_check_branch
        %525 = sbr.rel (%p523) target = $region60
      $region59: #{tpu_custom_call.1} parent=5 // pred_region
        %s526 = ssub.s32 %s18, 2
        // Predicated region
        $region61: #{tpu_custom_call.1} parent=59 // pred_check
          %p527 = pneg %p152
        $region62: #{tpu_custom_call.1} parent=59 // pred_check_branch
          %529 = sbr.rel (%p527) target = $region64
        $region63: #{tpu_custom_call.1} parent=59 // pred_region
          %s530 = sand.u32 %s137, 1
          %s531 = scalar_lea.sflag [#allocation8], %s530
          %s532 = sand.u32 %s137, 1
          %s533 = smul.addr %s532, 8
          %s534 = scalar_lea.vmem [#allocation12], %s533
          %535 = dma.done %s531, 128
        $region64: #{tpu_custom_call.1} parent=59 // pred_fallthru
          _
      $region60: #{tpu_custom_call.1} parent=5 // pred_fallthru
        _
    $region6: #{tpu_custom_call.1} parent=1 // loop_footer
      %s22 = sadd.s32 1, %s18
    $region7: #{tpu_custom_call.1} parent=1 // loop_footer_branch
      %17 = sbr.rel target = $region3
    $region8: #{tpu_custom_call.1} parent=1 // loop_exit
      _
    %536 = vsyncpa [#allocation7], 1
    %s537 = scalar_lea.sflag [#allocation7], 1
    %538 = vsyncpa %s537, 1
    %539 = vsyncpa [#allocation10], 1
    %s540 = scalar_lea.sflag [#allocation10], 1
    %541 = vsyncpa %s540, 1
    %542 = vsyncpa [#allocation8], 1
    %s543 = scalar_lea.sflag [#allocation8], 1
    %544 = vsyncpa %s543, 1

</llo_original>
